<compile_context>
chip_gen: v7x
topology: tpu7x:2x2x1
jax: 0.10.0
libtpu: 0.0.40
codegen_flags: <defaults>
</compile_context>

<pallas_src>
import functools

import jax
import jax.numpy as jnp
from jax import lax
from jax.experimental import pallas as pl
from jax.experimental.pallas import tpu as pltpu

EPS = 1e-5


# --------------------------------------------------------------------------------------
# tile-size helpers
# --------------------------------------------------------------------------------------
def _largest_divisor(n, cap, step):
    """Largest multiple of `step` that divides n and is <= cap, or None."""
    d = (min(n, cap) // step) * step
    while d >= step:
        if n % d == 0:
            return d
        d -= step
    return None


def _pick_row_tile(rows, row_bytes, target_bytes):
    if rows * row_bytes <= target_bytes:
        return rows
    cap = max(8, target_bytes // max(row_bytes, 1))
    for step in (512, 8):                     # prefer large, 8-aligned sublane tiles
        d = _largest_divisor(rows, cap, step)
        if d is not None:
            return d
    return _largest_divisor(rows, cap, 1) or rows


def _pick_batch_tile(batch, per_batch_bytes, target_bytes):
    cap = max(1, target_bytes // max(per_batch_bytes, 1))
    return _largest_divisor(batch, cap, 1) or 1


# --------------------------------------------------------------------------------------
# kernels
# --------------------------------------------------------------------------------------
def _stats_kernel(x_ref, o_ref):
    """Per-channel [sum, sum_sq] of one row tile -> (1, 2, C) partial."""
    x = x_ref[...].astype(jnp.float32)
    s = jnp.sum(x, axis=0, keepdims=True)
    sq = jnp.sum(x * x, axis=0, keepdims=True)
    o_ref[...] = jnp.concatenate([s, sq], axis=0)[None]


def _conv1_relu_kernel(x_ref, w1_ref, rb_ref, z_ref, st_ref, *,
                       K, pad, seq_len, compute_dtype):
    """z = relu(conv1(bn1(x))) for one batch tile, plus per-channel partial stats of z.

    x_ref : (TB*L, Cin)   raw input rows (whole batch elements; row r -> seq pos r % L)
    w1_ref: (K*Cin, Cin)  conv1 weights, tap-stacked, pre-scaled by the BN1 scale
    rb_ref: (L, Cin)      per-seq-position bias (BN1 shift folded over valid taps + conv1 bias)
    z_ref : (TB*L, Cin)   output activations
    st_ref: (1, 2, Cin)   partial [sum, sum_sq] of z (feeds BN2)
    """
    TBL, C = x_ref.shape
    TB = TBL // seq_len

    x = x_ref[...].astype(jnp.float32)
    # Sequence position of every row (blocks always cover whole batch elements).
    l_pos = lax.broadcasted_iota(jnp.int32, (TBL, 1), 0) % seq_len

    # Build the K shifted taps with an XLU roll over the row axis + a boundary mask.
    # The roll wraps across batch-element boundaries, but exactly those rows are the ones
    # masked to zero (== the conv's zero padding of the BN1 output), so this is exact.
    taps = []
    for k in range(K):
        d = k - pad
        if d == 0:
            taps.append(x)
        else:
            rolled = pltpu.roll(x, shift=(-d) % TBL, axis=0)
            keep = (l_pos + d >= 0) & (l_pos + d < seq_len)
            taps.append(jnp.where(keep, rolled, 0.0))
    stacked = jnp.concatenate(taps, axis=-1).astype(compute_dtype)      # (TBL, K*C)

    # Whole Conv1d(K) as one MXU matmul (BN1 scale already folded into w1_ref).
    acc = jnp.dot(stacked, w1_ref[...], preferred_element_type=jnp.float32)
    rb = rb_ref[...]
    if TB > 1:
        rb = jnp.concatenate([rb] * TB, axis=0)
    z = jnp.maximum(acc + rb, 0.0)                                      # (TBL, C) f32

    st_ref[...] = jnp.concatenate(
        [jnp.sum(z, axis=0, keepdims=True),
         jnp.sum(z * z, axis=0, keepdims=True)], axis=0)[None]
    z_ref[...] = z.astype(z_ref.dtype)


def _conv2_kernel(z_ref, w2_ref, b2_ref, o_ref, *, compute_dtype):
    """out = z @ w2_eff + b2_eff  (BN2 fully folded into w2_eff / b2_eff)."""
    z = z_ref[...].astype(compute_dtype)
    out = jnp.dot(z, w2_ref[...], preferred_element_type=jnp.float32) + b2_ref[...]
    # NOTE: Cout < 128 makes this a masked partial-lane store; a transposed layout (rows on
    # lanes) would be lane-dense but costs an extra full-output transpose in the wrapper.
    o_ref[...] = out.astype(o_ref.dtype)


# --------------------------------------------------------------------------------------
# wrapper
# --------------------------------------------------------------------------------------
def emission_layer_pallas(x, params, batch_first=False, *,
                          compute_dtype=jnp.float32,
                          row_tile_bytes=2 * 1024 * 1024,
                          batch_tile_bytes=8 * 1024 * 1024,
                          vmem_limit_bytes=32 * 1024 * 1024):
    """x: (L, B, Cin) if batch_first is False (PyTorch default), else (B, L, Cin)."""
    g1, be1, w1, b1, g2, be2, w2, b2 = [jnp.asarray(p, jnp.float32) for p in params]
    Cin, K = w1.shape[1], w1.shape[2]
    Cout = w2.shape[0]
    pad = K // 2

    x_blc = x if batch_first else jnp.transpose(x, (1, 0, 2))            # (B, L, Cin)
    B, L, _ = x_blc.shape
    R = B * L
    x2d = x_blc.reshape(R, Cin)                                          # row r = b*L + l

    compute_dtype = jnp.dtype(compute_dtype)
    z_dtype = jnp.bfloat16 if compute_dtype == jnp.dtype(jnp.bfloat16) else jnp.float32
    cparams = pltpu.CompilerParams(dimension_semantics=("parallel",),
                                   vmem_limit_bytes=vmem_limit_bytes)

    # ---------------- pass 1: BN1 batch statistics ----------------
    tr1 = _pick_row_tile(R, Cin * x2d.dtype.itemsize, row_tile_bytes)
    n1 = R // tr1
    stats1 = pl.pallas_call(
        _stats_kernel,
        grid=(n1,),
        in_specs=[pl.BlockSpec((tr1, Cin), lambda i: (i, 0))],
        out_specs=pl.BlockSpec((1, 2, Cin), lambda i: (i, 0, 0)),
        out_shape=jax.ShapeDtypeStruct((n1, 2, Cin), jnp.float32),
        compiler_params=cparams,
    )(x2d)
    stats1 = jnp.sum(stats1, axis=0)                                     # (2, Cin)
    mean1 = stats1[0] / R
    var1 = jnp.maximum(stats1[1] / R - mean1 * mean1, 0.0)               # biased (training BN)
    scale1 = g1 * lax.rsqrt(var1 + EPS)
    shift1 = be1 - mean1 * scale1

    # Fold BN1 into conv1: scale into the weights, shift into a per-row bias counting only
    # in-bounds taps (keeps the conv's zero padding of the BN1 output exact at the edges).
    w1_kio = jnp.transpose(w1, (2, 1, 0))                                # (K, Cin, Cin) [k, ci, co]
    w1_stacked = (w1_kio * scale1[None, :, None]).reshape(K * Cin, Cin).astype(compute_dtype)
    tap_contrib = jnp.einsum('i,kio->ko', shift1, w1_kio)                # (K, Cin)
    l_idx = jnp.arange(L)[:, None]
    k_idx = jnp.arange(K)[None, :]
    valid_lk = ((l_idx + k_idx - pad >= 0) & (l_idx + k_idx - pad < L)).astype(jnp.float32)
    row_bias = valid_lk @ tap_contrib + b1[None, :]                      # (L, Cin) f32

    # ---------------- pass 2: z = relu(conv1(bn1(x))) + BN2 partial stats ----------------
    # TODO(synk): very long sequences would additionally need L-tiling with halo exchange.
    per_b_bytes = L * Cin * 4 * (K + 6)     # rough live-buffer footprint per batch element
    tb = _pick_batch_tile(B, per_b_bytes, batch_tile_bytes)
    n2 = B // tb
    tbl = tb * L
    conv1_kernel = functools.partial(_conv1_relu_kernel, K=K, pad=pad,
                                     seq_len=L, compute_dtype=compute_dtype)
    z2d, stats2 = pl.pallas_call(
        conv1_kernel,
        grid=(n2,),
        in_specs=[pl.BlockSpec((tbl, Cin), lambda i: (i, 0)),
                  pl.BlockSpec((K * Cin, Cin), lambda i: (0, 0)),
                  pl.BlockSpec((L, Cin), lambda i: (0, 0))],
        out_specs=(pl.BlockSpec((tbl, Cin), lambda i: (i, 0)),
                   pl.BlockSpec((1, 2, Cin), lambda i: (i, 0, 0))),
        out_shape=(jax.ShapeDtypeStruct((R, Cin), z_dtype),
                   jax.ShapeDtypeStruct((n2, 2, Cin), jnp.float32)),
        compiler_params=cparams,
    )(x2d, w1_stacked, row_bias)
    stats2 = jnp.sum(stats2, axis=0)
    mean2 = stats2[0] / R
    var2 = jnp.maximum(stats2[1] / R - mean2 * mean2, 0.0)
    scale2 = g2 * lax.rsqrt(var2 + EPS)
    shift2 = be2 - mean2 * scale2

    # Fold BN2 into the 1x1 conv.
    w2_2d = jnp.transpose(w2[:, :, 0], (1, 0))                           # (Cin, Cout)
    w2_eff = (w2_2d * scale2[:, None]).astype(compute_dtype)
    b2_eff = (shift2 @ w2_2d + b2).reshape(1, Cout)                      # f32, added post-matmul

    # ---------------- pass 3: out = z @ w2_eff + b2_eff ----------------
    tr3 = _pick_row_tile(R, Cin * jnp.dtype(z_dtype).itemsize + Cout * x.dtype.itemsize,
                         row_tile_bytes)
    n3 = R // tr3
    conv2_kernel = functools.partial(_conv2_kernel, compute_dtype=compute_dtype)
    out2d = pl.pallas_call(
        conv2_kernel,
        grid=(n3,),
        in_specs=[pl.BlockSpec((tr3, Cin), lambda i: (i, 0)),
                  pl.BlockSpec((Cin, Cout), lambda i: (0, 0)),
                  pl.BlockSpec((1, Cout), lambda i: (0, 0))],
        out_specs=pl.BlockSpec((tr3, Cout), lambda i: (i, 0)),
        out_shape=jax.ShapeDtypeStruct((R, Cout), x.dtype),
        compiler_params=cparams,
    )(z2d, w2_eff, b2_eff)

    out = out2d.reshape(B, L, Cout)
    return out if batch_first else jnp.transpose(out, (1, 0, 2))         # (L, B, Cout)


# ----------------------------- pure-JAX reference -----------------------------
def emission_layer_ref(x, params, batch_first=False):
    g1, be1, w1_t, b1, g2, be2, w2_t, b2 = params
    K = w1_t.shape[2]
    pad = K // 2
    xb = jnp.transpose(x, (0, 2, 1)) if batch_first else jnp.transpose(x, (1, 2, 0))  # (B, C, L)

    def bn(v, g, b):
        m = jnp.mean(v, axis=(0, 2), keepdims=True)
        var = jnp.mean((v - m) ** 2, axis=(0, 2), keepdims=True)
        return (v - m) / jnp.sqrt(var + EPS) * g[None, :, None] + b[None, :, None]

    y = bn(xb, g1, be1)
    y = lax.conv_general_dilated(y, w1_t, (1,), [(pad, pad)],
                                 dimension_numbers=("NCH", "OIH", "NCH")) + b1[None, :, None]
    y = jnp.maximum(y, 0.0)
    y = bn(y, g2, be2)
    y = lax.conv_general_dilated(y, w2_t, (1,), [(0, 0)],
                                 dimension_numbers=("NCH", "OIH", "NCH")) + b2[None, :, None]
    return jnp.transpose(y, (0, 2, 1)) if batch_first else jnp.transpose(y, (2, 0, 1))


def init_params(key, in_size, out_size, kernel_size):
    ks = jax.random.split(key, 8)
    s1 = 1.0 / jnp.sqrt(in_size * kernel_size)
    s2 = 1.0 / jnp.sqrt(in_size)
    g1 = 1.0 + 0.1 * jax.random.normal(ks[0], (in_size,), jnp.float32)
    be1 = 0.1 * jax.random.normal(ks[1], (in_size,), jnp.float32)
    w1 = jax.random.uniform(ks[2], (in_size, in_size, kernel_size), jnp.float32, -s1, s1)
    b1 = jax.random.uniform(ks[3], (in_size,), jnp.float32, -s1, s1)
    g2 = 1.0 + 0.1 * jax.random.normal(ks[4], (in_size,), jnp.float32)
    be2 = 0.1 * jax.random.normal(ks[5], (in_size,), jnp.float32)
    w2 = jax.random.uniform(ks[6], (out_size, in_size, 1), jnp.float32, -s2, s2)
    b2 = jax.random.uniform(ks[7], (out_size,), jnp.float32, -s2, s2)
    return (g1, be1, w1, b1, g2, be2, w2, b2)


if __name__ == "__main__":
    key = jax.random.PRNGKey(0)
    k_x, k_p = jax.random.split(key)

    L, B, in_size, out_size, kernel_size = 16, 4, 32, 16, 3
    x = jax.random.normal(k_x, (L, B, in_size), jnp.float32)        # seq-major (batch_first=False)
    params = init_params(k_p, in_size, out_size, kernel_size)

    ref = jax.block_until_ready(emission_layer_ref(x, params, batch_first=False))

    # 1) f32 matmuls, default tiling (single tile at this size).
    out = jax.block_until_ready(emission_layer_pallas(x, params, batch_first=False))
    assert out.shape == (L, B, out_size), out.shape
    assert jnp.allclose(out, ref, atol=1e-4, rtol=1e-4), float(jnp.max(jnp.abs(out - ref)))

    # 2) Forced multi-tile grids (exercises the pipelined / partial-stats index maps).
    out_t = jax.block_until_ready(emission_layer_pallas(
        x, params, batch_first=False, row_tile_bytes=1024, batch_tile_bytes=1))
    assert jnp.allclose(out_t, ref, atol=1e-4, rtol=1e-4), float(jnp.max(jnp.abs(out_t - ref)))

    # 3) bf16 matmul operands (v6e/v7x MXU fast path); stats/accumulation stay f32.
    out_bf16 = jax.block_until_ready(emission_layer_pallas(
        x, params, batch_first=False, compute_dtype=jnp.bfloat16))
    assert jnp.allclose(out_bf16, ref, atol=7.5e-2, rtol=5e-2), \
        float(jnp.max(jnp.abs(out_bf16 - ref)))

    print("KERNEL_OK")
</pallas_src>

<mosaic_0001>
module attributes {stable_mosaic.version = 11 : i64} {
  func.func @_stats_kernel(%arg0: i32, %arg1: memref<64x32xf32, #tpu.memory_space<vmem>>, %arg2: memref<1x2x32xf32, #tpu.memory_space<vmem>>) attributes {dimension_semantics = [#tpu.dimension_semantics<parallel>], iteration_bounds = array<i64: 1>, scalar_prefetch = 0 : i64, scratch_operands = 0 : i64, tpu.core_type = #tpu.core_type<tc>, window_params = [{transform_indices = @transform_0, window_bounds = array<i64: 64, 32>}, {transform_indices = @transform_1, window_bounds = array<i64: 1, 2, 32>}]} {
    %c0 = arith.constant 0 : index
    %c0_0 = arith.constant 0 : index
    %0 = vector.load %arg1[%c0, %c0_0] : memref<64x32xf32, #tpu.memory_space<vmem>>, vector<64x32xf32>
    %cst = arith.constant dense<0.000000e+00> : vector<32xf32>
    %1 = vector.multi_reduction <add>, %0, %cst [0] : vector<64x32xf32> to vector<32xf32>
    %2 = vector.shape_cast %1 : vector<32xf32> to vector<1x32xf32>
    %3 = arith.mulf %0, %0 : vector<64x32xf32>
    %cst_1 = arith.constant dense<0.000000e+00> : vector<32xf32>
    %4 = vector.multi_reduction <add>, %3, %cst_1 [0] : vector<64x32xf32> to vector<32xf32>
    %5 = vector.shape_cast %4 : vector<32xf32> to vector<1x32xf32>
    %6 = tpu.concatenate %2, %5 in 0 : vector<1x32xf32>, vector<1x32xf32> -> vector<2x32xf32>
    %7 = vector.shape_cast %6 : vector<2x32xf32> to vector<1x2x32xf32>
    %c0_2 = arith.constant 0 : index
    %c0_3 = arith.constant 0 : index
    %c0_4 = arith.constant 0 : index
    %8 = vector.load %arg2[%c0_2, %c0_3, %c0_4] : memref<1x2x32xf32, #tpu.memory_space<vmem>>, vector<1x2x32xf32>
    tpu.vector_store %arg2[%c0_2, %c0_3, %c0_4], %7 {strides = array<i32>} : memref<1x2x32xf32, #tpu.memory_space<vmem>>, vector<1x2x32xf32>,
    return
  }
  func.func @transform_0(%arg0: i32) -> (i32, i32) {
    %c0_i32 = arith.constant 0 : i32
    %c0_i32_0 = arith.constant 0 : i32
    return %arg0, %c0_i32 : i32, i32
  }
  func.func @transform_1(%arg0: i32) -> (i32, i32, i32) {
    %c0_i32 = arith.constant 0 : i32
    %c0_i32_0 = arith.constant 0 : i32
    %c0_i32_1 = arith.constant 0 : i32
    return %arg0, %c0_i32, %c0_i32_0 : i32, i32, i32
  }
}

</mosaic_0001>

<llo_original>
// kernel: tpu_custom_call.1
$region0: #{tpu_custom_call.1}
  #allocation0 [shape = 'u32[]', space=smem, size = 0x4, offset = 0x4, fixed_abs, tag = 'smem constant byte address 0x4 - core index']
  #allocation1 [shape = 'u32[144,128]{1,0:T(1,128)}', space=vmem, size = 0x12000, scoped, tag = 'internal scratch']
  %s0 = inlined_call_operand.vmem [shape: f32[64,32], index: 0, kind: input, shape index: {}]
  %s1 = inlined_call_operand.hbm [shape: f32[1,2,32], index: 1, kind: output, shape index: {}]
  %s2 = sld [smem:[#allocation0]]
  $region14: #{tpu_custom_call.1} parent=0
    _
  %s4 = ssub.s32 1, %s2
  %s5 = scalar_select 0, %s4, %s2
  $region1: #{tpu_custom_call.1} parent=0
    #allocation2 [shape = 'u8[1024]{0}', space=vmem, size = 0x400, scoped, tag = 'output window, operand 0, single buffered']
    #allocation3 [shape = 's32[1]{0}', space=sflag, size = 0x4, scoped, tag = 'scoped memory for tpu_custom_call.1']
    %6 = vsyncpa [#allocation3], 0
    // Predicated region
    $region2: #{tpu_custom_call.1} parent=1 // pred_check
      _
    $region3: #{tpu_custom_call.1} parent=1 // pred_check_branch
      %8 = sbr.rel (0) target = $region5
    $region4: #{tpu_custom_call.1} parent=1 // pred_region
      _
    $region5: #{tpu_custom_call.1} parent=1 // pred_fallthru
      _
    %v9 = vld [vmem:[%s0] sm:$0xff]
    %v10 = vld [vmem:[%s0 + $0x8] sm:$0xff]
    %v11 = vld [vmem:[%s0 + $0x10] sm:$0xff]
    %v12 = vld [vmem:[%s0 + $0x18] sm:$0xff]
    %v13 = vld [vmem:[%s0 + $0x20] sm:$0xff]
    %v14 = vld [vmem:[%s0 + $0x28] sm:$0xff]
    %v15 = vld [vmem:[%s0 + $0x30] sm:$0xff]
    %v16 = vld [vmem:[%s0 + $0x38] sm:$0xff]
    %vm17 = vcmask 261120
    %v18 = vsel %vm17, %v9, 0.0
    %v19 = vsel %vm17, %v10, 0.0
    %v20 = vadd.f32 %v18, %v19
    %v21 = vsel %vm17, %v11, 0.0
    %v22 = vadd.f32 %v20, %v21
    %v23 = vsel %vm17, %v12, 0.0
    %v24 = vadd.f32 %v22, %v23
    %v25 = vsel %vm17, %v13, 0.0
    %v26 = vadd.f32 %v24, %v25
    %v27 = vsel %vm17, %v14, 0.0
    %v28 = vadd.f32 %v26, %v27
    %v29 = vsel %vm17, %v15, 0.0
    %v30 = vadd.f32 %v28, %v29
    %v31 = vsel %vm17, %v16, 0.0
    %v32 = vadd.f32 %v30, %v31
    %v33 = vrot.slane %v32, 4
    %v34 = vadd.f32 %v32, %v33
    %v35 = vrot.slane %v34, 2
    %v36 = vadd.f32 %v34, %v35
    %v37 = vrot.slane %v36, 1
    %v38 = vadd.f32 %v36, %v37
    %v39 = vmul.f32 %v9, %v9
    %v40 = vmul.f32 %v10, %v10
    %v41 = vmul.f32 %v11, %v11
    %v42 = vmul.f32 %v12, %v12
    %v43 = vmul.f32 %v13, %v13
    %v44 = vmul.f32 %v14, %v14
    %v45 = vmul.f32 %v15, %v15
    %v46 = vmul.f32 %v16, %v16
    %v47 = vsel %vm17, %v39, 0.0
    %v48 = vsel %vm17, %v40, 0.0
    %v49 = vadd.f32 %v47, %v48
    %v50 = vsel %vm17, %v41, 0.0
    %v51 = vadd.f32 %v49, %v50
    %v52 = vsel %vm17, %v42, 0.0
    %v53 = vadd.f32 %v51, %v52
    %v54 = vsel %vm17, %v43, 0.0
    %v55 = vadd.f32 %v53, %v54
    %v56 = vsel %vm17, %v44, 0.0
    %v57 = vadd.f32 %v55, %v56
    %v58 = vsel %vm17, %v45, 0.0
    %v59 = vadd.f32 %v57, %v58
    %v60 = vsel %vm17, %v46, 0.0
    %v61 = vadd.f32 %v59, %v60
    %v62 = vrot.slane %v61, 4
    %v63 = vadd.f32 %v61, %v62
    %v64 = vrot.slane %v63, 2
    %v65 = vadd.f32 %v63, %v64
    %v66 = vrot.slane %v65, 1
    %v67 = vadd.f32 %v65, %v66
    %vm68 = vcmask 1040384
    %v69 = vsel %vm68, %v38, %v67
    %vm70 = vcmask 254976
    %71 = vst.msk [vmem:[#allocation2] sm:$0x3] %vm70, %v69
    // Predicated region
    $region6: #{tpu_custom_call.1} parent=1 // pred_check
      _
    $region7: #{tpu_custom_call.1} parent=1 // pred_check_branch
      %73 = sbr.rel (0) target = $region9
    $region8: #{tpu_custom_call.1} parent=1 // pred_region
      %s75 = ssub.s32 32, 32
      %76 = vsyncadd [#allocation3], %s75
      %s78 = sshll.u32 [#allocation2], 4
      %s79 = int_to_ptr.vmem [resolvable:$true] %s78
      %81 = dma.vmem_to_hbm [thread:$0]  %s79, 32, %s1, [#allocation3]
    $region9: #{tpu_custom_call.1} parent=1 // pred_fallthru
      _
    // Predicated region
    $region10: #{tpu_custom_call.1} parent=1 // pred_check
      _
    $region11: #{tpu_custom_call.1} parent=1 // pred_check_branch
      %83 = sbr.rel (0) target = $region13
    $region12: #{tpu_custom_call.1} parent=1 // pred_region
      %84 = dma.done [#allocation3], 32
    $region13: #{tpu_custom_call.1} parent=1 // pred_fallthru
      _
    %85 = vsyncpa [#allocation3], 1

</llo_original>
